<compile_context>
chip_gen: v7x
topology: tpu7x:2x2x1
jax: 0.10.0
libtpu: 0.0.40
codegen_flags: <defaults>
</compile_context>

<pallas_src>
import jax
import jax.numpy as jnp
from jax.experimental import pallas as pl
from jax.experimental.pallas import tpu as pltpu


def _round_up(x, m):
    return ((x + m - 1) // m) * m


def mlp_kernel(x_ref, w1_ref, b1_ref, w2_ref, b2_ref, w3_ref, b3_ref, o_ref):
    """fc1 -> ReLU -> (dropout: identity in eval) -> fc2 -> ReLU -> (dropout) -> fc3."""
    x = x_ref[...]  # bf16 tile [TILE_B, in_features]

    # fc1 + ReLU (f32 accumulate, f32 elementwise)
    h1 = jnp.dot(x, w1_ref[...], preferred_element_type=jnp.float32)
    h1 = jnp.maximum(h1 + b1_ref[...].astype(jnp.float32), 0.0)
    # TODO(synk): nn.Dropout(p=0.3) is identity in eval mode; training-mode masking
    #             would use pltpu.prng_seed / pltpu.prng_random_bits with a seed
    #             varied per grid step (pl.program_id(0)).

    # fc2 + ReLU (re-cast activation to bf16 so the MXU runs at bf16 rate)
    h2 = jnp.dot(h1.astype(jnp.bfloat16), w2_ref[...],
                 preferred_element_type=jnp.float32)
    h2 = jnp.maximum(h2 + b2_ref[...].astype(jnp.float32), 0.0)

    # fc3 (logits, no activation); lane dim is pre-padded to a multiple of 128,
    # so this is an unmasked lane-dense store.
    h3 = jnp.dot(h2.astype(jnp.bfloat16), w3_ref[...],
                 preferred_element_type=jnp.float32)
    o_ref[...] = h3 + b3_ref[...].astype(jnp.float32)


def neural_network_forward(x, params, tile_b=256):
    """x: [B, input_size] float32. params: dict of w1,b1,w2,b2,w3,b3 (f32, [in,out])."""
    w1, b1, w2, b2, w3, b3 = (params[k] for k in ("w1", "b1", "w2", "b2", "w3", "b3"))
    batch, in_features = x.shape
    num_classes = w3.shape[1]

    # --- wrapper-side layout / dtype plumbing ---------------------------------
    # Pad logits lane dim to a multiple of 128 for lane-dense output stores.
    n_pad = _round_up(num_classes, 128)
    w3p = jnp.pad(w3, ((0, 0), (0, n_pad - num_classes)))
    b3p = jnp.pad(b3, ((0, 0), (0, n_pad - num_classes)))

    # Batch tiling: don't over-pad tiny batches; keep tile a multiple of 8.
    # tile_b=256 keeps per-step VMEM (x/out tiles + h1/h2 f32 intermediates +
    # resident bf16 weights ~300 KB) far under v7x's 32 MiB scoped default.
    tile_b = max(8, min(tile_b, _round_up(batch, 8)))
    b_pad = _round_up(batch, tile_b)
    xp = jnp.pad(x, ((0, b_pad - batch), (0, 0)))

    # bf16 at the edges, f32 accumulation inside the kernel.
    bf16 = jnp.bfloat16
    xp = xp.astype(bf16)
    w1b, b1b = w1.astype(bf16), b1.astype(bf16)
    w2b, b2b = w2.astype(bf16), b2.astype(bf16)
    w3b, b3b = w3p.astype(bf16), b3p.astype(bf16)

    grid = (b_pad // tile_b,)

    def resident(shape):
        # Full-array block, same block index every grid step -> DMA'd once,
        # stays resident in VMEM while only activations stream.
        return pl.BlockSpec(shape, lambda i: (0, 0))

    out_padded = pl.pallas_call(
        mlp_kernel,
        out_shape=jax.ShapeDtypeStruct((b_pad, n_pad), jnp.float32),
        grid=grid,
        in_specs=[
            pl.BlockSpec((tile_b, in_features), lambda i: (i, 0)),
            resident(w1b.shape), resident(b1b.shape),
            resident(w2b.shape), resident(b2b.shape),
            resident(w3b.shape), resident(b3b.shape),
        ],
        out_specs=pl.BlockSpec((tile_b, n_pad), lambda i: (i, 0)),
        compiler_params=pltpu.CompilerParams(
            dimension_semantics=("parallel",)),  # shard batch tiles across TCs (v7x)
    )(xp, w1b, b1b, w2b, b2b, w3b, b3b)

    return out_padded[:batch, :num_classes]


def init_params(input_size, num_classes, seed=42):
    """Deterministic synthetic parameters mirroring nn.Linear shapes
    (stored transposed: [in, out])."""
    key = jax.random.PRNGKey(seed)
    ks = jax.random.split(key, 6)

    def linear(kw, kb, fan_in, fan_out):
        bound = 1.0 / jnp.sqrt(jnp.float32(fan_in))
        w = jax.random.uniform(kw, (fan_in, fan_out), jnp.float32, -bound, bound)
        b = jax.random.uniform(kb, (1, fan_out), jnp.float32, -bound, bound)
        return w, b

    w1, b1 = linear(ks[0], ks[1], input_size, 512)
    w2, b2 = linear(ks[2], ks[3], 512, 256)
    w3, b3 = linear(ks[4], ks[5], 256, num_classes)
    return {"w1": w1, "b1": b1, "w2": w2, "b2": b2, "w3": w3, "b3": b3}


if __name__ == "__main__":
    input_size = 32
    num_classes = 10
    batch = 8

    params = init_params(input_size, num_classes)
    x = jax.random.normal(jax.random.PRNGKey(0), (batch, input_size), jnp.float32)

    out = neural_network_forward(x, params)
    out = jax.block_until_ready(out)

    # Reference check in plain JAX f32 (eval-mode dropout = identity).
    # Tolerance relaxed because the kernel path uses bf16 inputs/weights with
    # f32 accumulation.
    h1 = jnp.maximum(x @ params["w1"] + params["b1"], 0.0)
    h2 = jnp.maximum(h1 @ params["w2"] + params["b2"], 0.0)
    ref = h2 @ params["w3"] + params["b3"]
    assert out.shape == (batch, num_classes)
    assert jnp.allclose(out, ref, atol=3e-2, rtol=3e-2), (
        float(jnp.max(jnp.abs(out - ref))))

    print("KERNEL_OK")
</pallas_src>

<mosaic_0001>
module attributes {stable_mosaic.version = 11 : i64} {
  func.func @mlp_kernel(%arg0: i32, %arg1: memref<8x32xbf16, #tpu.memory_space<vmem>>, %arg2: memref<32x512xbf16, #tpu.memory_space<vmem>>, %arg3: memref<1x512xbf16, #tpu.memory_space<vmem>>, %arg4: memref<512x256xbf16, #tpu.memory_space<vmem>>, %arg5: memref<1x256xbf16, #tpu.memory_space<vmem>>, %arg6: memref<256x128xbf16, #tpu.memory_space<vmem>>, %arg7: memref<1x128xbf16, #tpu.memory_space<vmem>>, %arg8: memref<8x128xf32, #tpu.memory_space<vmem>>) attributes {dimension_semantics = [#tpu.dimension_semantics<parallel>], iteration_bounds = array<i64: 1>, scalar_prefetch = 0 : i64, scratch_operands = 0 : i64, tpu.core_type = #tpu.core_type<tc>, window_params = [{transform_indices = @transform_0, window_bounds = array<i64: 8, 32>}, {pipeline_mode = #tpu.pipeline_mode<synchronous>, transform_indices = @transform_1, window_bounds = array<i64: 32, 512>}, {pipeline_mode = #tpu.pipeline_mode<synchronous>, transform_indices = @transform_2, window_bounds = array<i64: 1, 512>}, {pipeline_mode = #tpu.pipeline_mode<synchronous>, transform_indices = @transform_3, window_bounds = array<i64: 512, 256>}, {pipeline_mode = #tpu.pipeline_mode<synchronous>, transform_indices = @transform_4, window_bounds = array<i64: 1, 256>}, {pipeline_mode = #tpu.pipeline_mode<synchronous>, transform_indices = @transform_5, window_bounds = array<i64: 256, 128>}, {pipeline_mode = #tpu.pipeline_mode<synchronous>, transform_indices = @transform_6, window_bounds = array<i64: 1, 128>}, {transform_indices = @transform_7, window_bounds = array<i64: 8, 128>}]} {
    %c0 = arith.constant 0 : index
    %c0_0 = arith.constant 0 : index
    %0 = vector.load %arg1[%c0, %c0_0] : memref<8x32xbf16, #tpu.memory_space<vmem>>, vector<8x32xbf16>
    %c0_1 = arith.constant 0 : index
    %c0_2 = arith.constant 0 : index
    %1 = vector.load %arg2[%c0_1, %c0_2] : memref<32x512xbf16, #tpu.memory_space<vmem>>, vector<32x512xbf16>
    %cst = arith.constant dense<0.000000e+00> : vector<8x512xf32>
    %2 = tpu.matmul %0, %1, %cst {dimension_numbers = #tpu.dot_dimension_numbers<[1], [0], [0], [1], [0, 0, 1, 1], [], []>} : vector<8x32xbf16>, vector<32x512xbf16>, vector<8x512xf32> -> vector<8x512xf32>
    %c0_3 = arith.constant 0 : index
    %c0_4 = arith.constant 0 : index
    %3 = vector.load %arg3[%c0_3, %c0_4] : memref<1x512xbf16, #tpu.memory_space<vmem>>, vector<1x512xbf16>
    %4 = arith.extf %3 : vector<1x512xbf16> to vector<1x512xf32>
    %5 = vector.broadcast %4 : vector<1x512xf32> to vector<8x512xf32>
    %6 = arith.addf %2, %5 : vector<8x512xf32>
    %cst_5 = arith.constant 0.000000e+00 : f32
    %7 = vector.broadcast %cst_5 : f32 to vector<8x512xf32>
    %8 = arith.maximumf %6, %7 : vector<8x512xf32>
    %9 = arith.truncf %8 : vector<8x512xf32> to vector<8x512xbf16>
    %c0_6 = arith.constant 0 : index
    %c0_7 = arith.constant 0 : index
    %10 = vector.load %arg4[%c0_6, %c0_7] : memref<512x256xbf16, #tpu.memory_space<vmem>>, vector<512x256xbf16>
    %cst_8 = arith.constant dense<0.000000e+00> : vector<8x256xf32>
    %11 = tpu.matmul %9, %10, %cst_8 {dimension_numbers = #tpu.dot_dimension_numbers<[1], [0], [0], [1], [0, 0, 1, 1], [], []>} : vector<8x512xbf16>, vector<512x256xbf16>, vector<8x256xf32> -> vector<8x256xf32>
    %c0_9 = arith.constant 0 : index
    %c0_10 = arith.constant 0 : index
    %12 = vector.load %arg5[%c0_9, %c0_10] : memref<1x256xbf16, #tpu.memory_space<vmem>>, vector<1x256xbf16>
    %13 = arith.extf %12 : vector<1x256xbf16> to vector<1x256xf32>
    %14 = vector.broadcast %13 : vector<1x256xf32> to vector<8x256xf32>
    %15 = arith.addf %11, %14 : vector<8x256xf32>
    %cst_11 = arith.constant 0.000000e+00 : f32
    %16 = vector.broadcast %cst_11 : f32 to vector<8x256xf32>
    %17 = arith.maximumf %15, %16 : vector<8x256xf32>
    %18 = arith.truncf %17 : vector<8x256xf32> to vector<8x256xbf16>
    %c0_12 = arith.constant 0 : index
    %c0_13 = arith.constant 0 : index
    %19 = vector.load %arg6[%c0_12, %c0_13] : memref<256x128xbf16, #tpu.memory_space<vmem>>, vector<256x128xbf16>
    %cst_14 = arith.constant dense<0.000000e+00> : vector<8x128xf32>
    %20 = tpu.matmul %18, %19, %cst_14 {dimension_numbers = #tpu.dot_dimension_numbers<[1], [0], [0], [1], [0, 0, 1, 1], [], []>} : vector<8x256xbf16>, vector<256x128xbf16>, vector<8x128xf32> -> vector<8x128xf32>
    %c0_15 = arith.constant 0 : index
    %c0_16 = arith.constant 0 : index
    %21 = vector.load %arg7[%c0_15, %c0_16] : memref<1x128xbf16, #tpu.memory_space<vmem>>, vector<1x128xbf16>
    %22 = arith.extf %21 : vector<1x128xbf16> to vector<1x128xf32>
    %23 = vector.broadcast %22 : vector<1x128xf32> to vector<8x128xf32>
    %24 = arith.addf %20, %23 : vector<8x128xf32>
    %c0_17 = arith.constant 0 : index
    %c0_18 = arith.constant 0 : index
    %25 = vector.load %arg8[%c0_17, %c0_18] : memref<8x128xf32, #tpu.memory_space<vmem>>, vector<8x128xf32>
    tpu.vector_store %arg8[%c0_17, %c0_18], %24 {strides = array<i32>} : memref<8x128xf32, #tpu.memory_space<vmem>>, vector<8x128xf32>,
    return
  }
  func.func @transform_0(%arg0: i32) -> (i32, i32) {
    %c0_i32 = arith.constant 0 : i32
    %c0_i32_0 = arith.constant 0 : i32
    return %arg0, %c0_i32 : i32, i32
  }
  func.func @transform_1(%arg0: i32) -> (i32, i32) {
    %c0_i32 = arith.constant 0 : i32
    %c0_i32_0 = arith.constant 0 : i32
    %c0_i32_1 = arith.constant 0 : i32
    return %c0_i32, %c0_i32_0 : i32, i32
  }
  func.func @transform_2(%arg0: i32) -> (i32, i32) {
    %c0_i32 = arith.constant 0 : i32
    %c0_i32_0 = arith.constant 0 : i32
    %c0_i32_1 = arith.constant 0 : i32
    return %c0_i32, %c0_i32_0 : i32, i32
  }
  func.func @transform_3(%arg0: i32) -> (i32, i32) {
    %c0_i32 = arith.constant 0 : i32
    %c0_i32_0 = arith.constant 0 : i32
    %c0_i32_1 = arith.constant 0 : i32
    return %c0_i32, %c0_i32_0 : i32, i32
  }
  func.func @transform_4(%arg0: i32) -> (i32, i32) {
    %c0_i32 = arith.constant 0 : i32
    %c0_i32_0 = arith.constant 0 : i32
    %c0_i32_1 = arith.constant 0 : i32
    return %c0_i32, %c0_i32_0 : i32, i32
  }
  func.func @transform_5(%arg0: i32) -> (i32, i32) {
    %c0_i32 = arith.constant 0 : i32
    %c0_i32_0 = arith.constant 0 : i32
    %c0_i32_1 = arith.constant 0 : i32
    return %c0_i32, %c0_i32_0 : i32, i32
  }
  func.func @transform_6(%arg0: i32) -> (i32, i32) {
    %c0_i32 = arith.constant 0 : i32
    %c0_i32_0 = arith.constant 0 : i32
    %c0_i32_1 = arith.constant 0 : i32
    return %c0_i32, %c0_i32_0 : i32, i32
  }
  func.func @transform_7(%arg0: i32) -> (i32, i32) {
    %c0_i32 = arith.constant 0 : i32
    %c0_i32_0 = arith.constant 0 : i32
    return %arg0, %c0_i32 : i32, i32
  }
}

</mosaic_0001>

<llo_original>
// kernel: tpu_custom_call.1
$region0: #{tpu_custom_call.1}
  #allocation0 [shape = 'u32[]', space=smem, size = 0x4, offset = 0x4, fixed_abs, tag = 'smem constant byte address 0x4 - core index']
  #allocation1 [shape = 'u32[144,128]{1,0:T(1,128)}', space=vmem, size = 0x12000, scoped, tag = 'internal scratch']
  %s0 = inlined_call_operand.hbm [shape: bf16[8,32], index: 0, kind: input, shape index: {}]
  %s1 = inlined_call_operand.hbm [shape: bf16[32,512], index: 1, kind: input, shape index: {}]
  %s2 = inlined_call_operand.vmem [shape: bf16[1,512], index: 2, kind: input, shape index: {}]
  %s3 = inlined_call_operand.hbm [shape: bf16[512,256], index: 3, kind: input, shape index: {}]
  %s4 = inlined_call_operand.vmem [shape: bf16[1,256], index: 4, kind: input, shape index: {}]
  %s5 = inlined_call_operand.hbm [shape: bf16[256,128], index: 5, kind: input, shape index: {}]
  %s6 = inlined_call_operand.vmem [shape: bf16[1,128], index: 6, kind: input, shape index: {}]
  %s7 = inlined_call_operand.hbm [shape: f32[8,128], index: 7, kind: output, shape index: {}]
  %s8 = sld [smem:[#allocation0]]
  $region54: #{tpu_custom_call.1} parent=0
    _
  %s10 = ssub.s32 1, %s8
  %s11 = scalar_select 0, %s10, %s8
  $region1: #{tpu_custom_call.1} parent=0
    #allocation2 [shape = 'u8[2048]{0}', space=vmem, size = 0x800, scoped, tag = 'input window, operand 0, single buffered']
    #allocation3 [shape = 's32[1]{0}', space=sflag, size = 0x4, scoped, tag = 'scoped memory for tpu_custom_call.1']
    #allocation4 [shape = 's32[1]{0}', space=sflag, size = 0x4, scoped, tag = 'scoped memory for tpu_custom_call.1']
    #allocation5 [shape = 'u8[32768]{0}', space=vmem, size = 0x8000, scoped, tag = 'input window, operand 1, single buffered']
    #allocation6 [shape = 's32[1]{0}', space=sflag, size = 0x4, scoped, tag = 'scoped memory for tpu_custom_call.1']
    #allocation7 [shape = 'u8[262144]{0}', space=vmem, size = 0x40000, scoped, tag = 'input window, operand 3, single buffered']
    #allocation8 [shape = 'u8[65536]{0}', space=vmem, size = 0x10000, scoped, tag = 'input window, operand 5, single buffered']
    #allocation9 [shape = 's32[1]{0}', space=sflag, size = 0x4, scoped, tag = 'scoped memory for tpu_custom_call.1']
    #allocation10 [shape = 'u8[4096]{0}', space=vmem, size = 0x1000, scoped, tag = 'output window, operand 0, single buffered']
    %12 = vsyncpa [#allocation3], 0
    %13 = vsyncpa [#allocation6], 0
    %14 = vsyncpa [#allocation9], 0
    %15 = vsyncpa [#allocation4], 0
    // Predicated region
    $region2: #{tpu_custom_call.1} parent=1 // pred_check
      _
    $region3: #{tpu_custom_call.1} parent=1 // pred_check_branch
      %17 = sbr.rel (0) target = $region5
    $region4: #{tpu_custom_call.1} parent=1 // pred_region
      %s19 = ssub.s32 64, 64
      %20 = vsyncadd [#allocation3], %s19
      %s22 = sshll.u32 [#allocation2], 4
      %s23 = int_to_ptr.vmem [resolvable:$true] %s22
      %25 = dma.hbm_to_vmem [thread:$0]  %s0, 64, %s23, [#allocation3]
    $region5: #{tpu_custom_call.1} parent=1 // pred_fallthru
      _
    // Predicated region
    $region6: #{tpu_custom_call.1} parent=1 // pred_check
      _
    $region7: #{tpu_custom_call.1} parent=1 // pred_check_branch
      %27 = sbr.rel (0) target = $region9
    $region8: #{tpu_custom_call.1} parent=1 // pred_region
      %s29 = ssub.s32 1024, 1024
      %30 = vsyncadd [#allocation6], %s29
      %s31 = sshll.u32 [#allocation5], 4
      %s32 = int_to_ptr.vmem [resolvable:$true] %s31
      %37 = dma.hbm_to_vmem [thread:$0]  %s1, 1024, %s32, [#allocation6], 256, 256, 16
    $region9: #{tpu_custom_call.1} parent=1 // pred_fallthru
      _
    // Predicated region
    $region10: #{tpu_custom_call.1} parent=1 // pred_check
      _
    $region11: #{tpu_custom_call.1} parent=1 // pred_check_branch
      %39 = sbr.rel (0) target = $region13
    $region12: #{tpu_custom_call.1} parent=1 // pred_region
      _
    $region13: #{tpu_custom_call.1} parent=1 // pred_fallthru
      _
    // Predicated region
    $region14: #{tpu_custom_call.1} parent=1 // pred_check
      _
    $region15: #{tpu_custom_call.1} parent=1 // pred_check_branch
      %41 = sbr.rel (0) target = $region17
    $region16: #{tpu_custom_call.1} parent=1 // pred_region
      %s43 = ssub.s32 8192, 8192
      %44 = vsyncadd [#allocation6], %s43
      %s45 = sshll.u32 [#allocation7], 4
      %s46 = int_to_ptr.vmem [resolvable:$true] %s45
      %51 = dma.hbm_to_vmem [thread:$0]  %s3, 8192, %s46, [#allocation6], 128, 128, 8
    $region17: #{tpu_custom_call.1} parent=1 // pred_fallthru
      _
    // Predicated region
    $region18: #{tpu_custom_call.1} parent=1 // pred_check
      _
    $region19: #{tpu_custom_call.1} parent=1 // pred_check_branch
      %53 = sbr.rel (0) target = $region21
    $region20: #{tpu_custom_call.1} parent=1 // pred_region
      _
    $region21: #{tpu_custom_call.1} parent=1 // pred_fallthru
      _
    // Predicated region
    $region22: #{tpu_custom_call.1} parent=1 // pred_check
      _
    $region23: #{tpu_custom_call.1} parent=1 // pred_check_branch
      %55 = sbr.rel (0) target = $region25
    $region24: #{tpu_custom_call.1} parent=1 // pred_region
      %s57 = ssub.s32 2048, 2048
      %58 = vsyncadd [#allocation9], %s57
      %s59 = sshll.u32 [#allocation8], 4
      %s60 = int_to_ptr.vmem [resolvable:$true] %s59
      %65 = dma.hbm_to_vmem [thread:$0]  %s5, 2048, %s60, [#allocation9], 64, 64, 4
    $region25: #{tpu_custom_call.1} parent=1 // pred_fallthru
      _
    // Predicated region
    $region26: #{tpu_custom_call.1} parent=1 // pred_check
      _
    $region27: #{tpu_custom_call.1} parent=1 // pred_check_branch
      %67 = sbr.rel (0) target = $region29
    $region28: #{tpu_custom_call.1} parent=1 // pred_region
      _
    $region29: #{tpu_custom_call.1} parent=1 // pred_fallthru
      _
    // Predicated region
    $region30: #{tpu_custom_call.1} parent=1 // pred_check
      _
    $region31: #{tpu_custom_call.1} parent=1 // pred_check_branch
      %69 = sbr.rel (0) target = $region33
    $region32: #{tpu_custom_call.1} parent=1 // pred_region
      %70 = dma.done [#allocation3], 64
    $region33: #{tpu_custom_call.1} parent=1 // pred_fallthru
      _
    // Predicated region
    $region34: #{tpu_custom_call.1} parent=1 // pred_check
      _
    $region35: #{tpu_custom_call.1} parent=1 // pred_check_branch
      %72 = sbr.rel (0) target = $region37
    $region36: #{tpu_custom_call.1} parent=1 // pred_region
      %73 = dma.done [#allocation6], 1024
    $region37: #{tpu_custom_call.1} parent=1 // pred_fallthru
      _
    // Predicated region
    $region38: #{tpu_custom_call.1} parent=1 // pred_check
      _
    $region39: #{tpu_custom_call.1} parent=1 // pred_check_branch
      %75 = sbr.rel (0) target = $region41
    $region40: #{tpu_custom_call.1} parent=1 // pred_region
      %76 = dma.done [#allocation6], 8192
    $region41: #{tpu_custom_call.1} parent=1 // pred_fallthru
      _
    // Predicated region
    $region42: #{tpu_custom_call.1} parent=1 // pred_check
      _
    $region43: #{tpu_custom_call.1} parent=1 // pred_check_branch
      %78 = sbr.rel (0) target = $region45
    $region44: #{tpu_custom_call.1} parent=1 // pred_region
      %79 = dma.done [#allocation9], 2048
    $region45: #{tpu_custom_call.1} parent=1 // pred_fallthru
      _
    %v81 = vld [vmem:[#allocation2] sm:$0xf]
    %v82 = vld [vmem:[#allocation5] sm:$0xff]
    %v83 = vld [vmem:[#allocation5 + $0x8] sm:$0xff]
    %v84 = vld [vmem:[#allocation5 + $0x10] sm:$0xff]
    %v85 = vld [vmem:[#allocation5 + $0x18] sm:$0xff]
    %v86 = vld [vmem:[#allocation5 + $0x20] sm:$0xff]
    %v87 = vld [vmem:[#allocation5 + $0x28] sm:$0xff]
    %v88 = vld [vmem:[#allocation5 + $0x30] sm:$0xff]
    %v89 = vld [vmem:[#allocation5 + $0x38] sm:$0xff]
    %v90 = vld [vmem:[%s2] sm:$0xf]
    %v91 = vunpack.c.l.bf16 %v90
    %v93 = vlaneseq
    %v94 = vshrl.u32 %v93, 7
    %v95 = vsub.s32 0, %v94
    %v96 = vrot.slane %v91, %v95
    %v97 = vlaneseq
    %v98 = vshrl.u32 %v97, 7
    %v99 = vsub.s32 2, %v98
    %v100 = vrot.slane %v91, %v99
    %v101 = vlaneseq
    %v102 = vshrl.u32 %v101, 7
    %v103 = vsub.s32 4, %v102
    %v104 = vrot.slane %v91, %v103
    %v105 = vlaneseq
    %v106 = vshrl.u32 %v105, 7
    %v107 = vsub.s32 6, %v106
    %v108 = vrot.slane %v91, %v107
    %v113 = vlaneseq
    %v114 = vshrl.u32 %v113, 7
    %v115 = vsub.s32 0, %v114
    %v116 = vrot.slane %v96, %v115
    %v117 = vlaneseq
    %v118 = vshrl.u32 %v117, 7
    %v119 = vsub.s32 0, %v118
    %v120 = vrot.slane %v100, %v119
    %v121 = vlaneseq
    %v122 = vshrl.u32 %v121, 7
    %v123 = vsub.s32 0, %v122
    %v124 = vrot.slane %v104, %v123
    %v125 = vlaneseq
    %v126 = vshrl.u32 %v125, 7
    %v127 = vsub.s32 0, %v126
    %v128 = vrot.slane %v108, %v127
    %v137 = vunpack.c.l.b16 %v82
    %v138 = vunpack.c.h.b16 %v82
    %v139 = vunpack.c.l.b16 %v83
    %v140 = vunpack.c.h.b16 %v83
    %v141 = vunpack.c.l.b16 %v84
    %v142 = vunpack.c.h.b16 %v84
    %v143 = vunpack.c.l.b16 %v85
    %v144 = vunpack.c.h.b16 %v85
    %v145 = vunpack.c.l.b16 %v86
    %v146 = vunpack.c.h.b16 %v86
    %v147 = vunpack.c.l.b16 %v87
    %v148 = vunpack.c.h.b16 %v87
    %v149 = vunpack.c.l.b16 %v88
    %v150 = vunpack.c.h.b16 %v88
    %v151 = vunpack.c.l.b16 %v89
    %v152 = vunpack.c.h.b16 %v89
    %v153 = vpack.c.b16 %v141, %v137
    %v154 = vpack.c.b16 %v142, %v138
    %v155 = vpack.c.b16 %v143, %v139
    %v156 = vpack.c.b16 %v144, %v140
    %v157 = vpack.c.b16 %v149, %v145
    %v158 = vpack.c.b16 %v150, %v146
    %v159 = vpack.c.b16 %v151, %v147
    %v160 = vpack.c.b16 %v152, %v148
    %vm169 = vcmask 261120
    %v171 = vsel %vm169, %v81, 0
    %173 = vmatprep.subr.bf16.mxu0 %v154
    %174 = vmatpush1.bf16.msra.mxu0 %v153
    %175 = vmatprep.subr.bf16.mxu0 %v158
    %176 = vmatpush1.bf16.msra.mxu0 %v157
    %177 = vmatprep.subr.bf16.mxu0 0
    %178 = vmatpush1.bf16.msra.mxu0 0
    %179 = vmatprep.subr.bf16.mxu0 0
    %180 = vmatpush1.bf16.msra.mxu0 0
    %181 = vmatprep.subr.bf16.mxu0 0
    %182 = vmatpush1.bf16.msra.mxu0 0
    %183 = vmatprep.subr.bf16.mxu0 0
    %184 = vmatpush1.bf16.msra.mxu0 0
    %185 = vmatprep.subr.bf16.mxu0 0
    %186 = vmatpush1.bf16.msra.mxu0 0
    %187 = vmatprep.subr.bf16.mxu0 0
    %188 = vmatpush1.bf16.msra.mxu0 0
    %189 = vmatprep.subr.bf16.mxu0 0
    %190 = vmatpush1.bf16.msra.mxu0 0
    %191 = vmatprep.subr.bf16.mxu0 0
    %192 = vmatpush1.bf16.msra.mxu0 0
    %193 = vmatprep.subr.bf16.mxu0 0
    %194 = vmatpush1.bf16.msra.mxu0 0
    %195 = vmatprep.subr.bf16.mxu0 0
    %196 = vmatpush1.bf16.msra.mxu0 0
    %197 = vmatprep.subr.bf16.mxu0 0
    %198 = vmatpush1.bf16.msra.mxu0 0
    %199 = vmatprep.subr.bf16.mxu0 0
    %200 = vmatpush1.bf16.msra.mxu0 0
    %201 = vmatprep.subr.bf16.mxu0 0
    %202 = vmatpush1.bf16.msra.mxu0 0
    %203 = vmatprep.subr.bf16.mxu0 0
    %204 = vmatpush1.bf16.msra.mxu0 0
    %205 = vmatprep.mubr.bf16.mxu0 0
    %206 = vmatmul.mubr.bf16.gmra.mrb[0].mxu0 %v171
    %v207 = vpop.f32.mrb[0].mxu0
    %v208 = vadd.f32 %v116, %v207
    %v209 = vpop.f32.mrb[0].mxu0
    %v210 = vadd.f32 %v120, %v209
    %v211 = vpop.f32.mrb[0].mxu0
    %v212 = vpop.f32.mrb[0].mxu0
    %213 = vdwg.mxu0
    %214 = vmatprep.subr.bf16.mxu0 %v156
    %215 = vmatpush1.bf16.msra.mxu0 %v155
    %216 = vmatprep.subr.bf16.mxu0 %v160
    %217 = vmatpush1.bf16.msra.mxu0 %v159
    %218 = vmatprep.subr.bf16.mxu0 0
    %219 = vmatpush1.bf16.msra.mxu0 0
    %220 = vmatprep.subr.bf16.mxu0 0
    %221 = vmatpush1.bf16.msra.mxu0 0
    %222 = vmatprep.subr.bf16.mxu0 0
    %223 = vmatpush1.bf16.msra.mxu0 0
    %224 = vmatprep.subr.bf16.mxu0 0
    %225 = vmatpush1.bf16.msra.mxu0 0
    %226 = vmatprep.subr.bf16.mxu0 0
    %227 = vmatpush1.bf16.msra.mxu0 0
    %228 = vmatprep.subr.bf16.mxu0 0
    %229 = vmatpush1.bf16.msra.mxu0 0
    %230 = vmatprep.subr.bf16.mxu0 0
    %231 = vmatpush1.bf16.msra.mxu0 0
    %232 = vmatprep.subr.bf16.mxu0 0
    %233 = vmatpush1.bf16.msra.mxu0 0
    %234 = vmatprep.subr.bf16.mxu0 0
    %235 = vmatpush1.bf16.msra.mxu0 0
    %236 = vmatprep.subr.bf16.mxu0 0
    %237 = vmatpush1.bf16.msra.mxu0 0
    %238 = vmatprep.subr.bf16.mxu0 0
    %239 = vmatpush1.bf16.msra.mxu0 0
    %240 = vmatprep.subr.bf16.mxu0 0
    %241 = vmatpush1.bf16.msra.mxu0 0
    %242 = vmatprep.subr.bf16.mxu0 0
    %243 = vmatpush1.bf16.msra.mxu0 0
    %244 = vmatprep.subr.bf16.mxu0 0
    %245 = vmatpush1.bf16.msra.mxu0 0
    %246 = vmatprep.mubr.bf16.mxu0 0
    %247 = vmatmul.mubr.bf16.gmra.mrb[0].mxu0 %v171
    %v248 = vpop.f32.mrb[0].mxu0
    %v249 = vadd.f32 %v124, %v248
    %v250 = vpop.f32.mrb[0].mxu0
    %v251 = vadd.f32 %v128, %v250
    %v252 = vpop.f32.mrb[0].mxu0
    %v253 = vpop.f32.mrb[0].mxu0
    %254 = vdwg.mxu0
    %v255 = vmax.f32 %v208, 0.0
    %v256 = vmax.f32 %v210, 0.0
    %v257 = vmax.f32 %v249, 0.0
    %v258 = vmax.f32 %v251, 0.0
    %v259 = vpack.c.bf16 %v255, %v255
    %v260 = vpack.c.bf16 %v256, %v256
    %v261 = vpack.c.bf16 %v257, %v257
    %v262 = vpack.c.bf16 %v258, %v258
    %v263 = vld [vmem:[#allocation7] sm:$0xff]
    %v264 = vld [vmem:[#allocation7 + $0x8] sm:$0xff]
    %v265 = vld [vmem:[#allocation7 + $0x10] sm:$0xff]
    %v266 = vld [vmem:[#allocation7 + $0x18] sm:$0xff]
    %v267 = vld [vmem:[#allocation7 + $0x20] sm:$0xff]
    %v268 = vld [vmem:[#allocation7 + $0x28] sm:$0xff]
    %v269 = vld [vmem:[#allocation7 + $0x30] sm:$0xff]
    %v270 = vld [vmem:[#allocation7 + $0x38] sm:$0xff]
    %v271 = vld [vmem:[#allocation7 + $0x40] sm:$0xff]
    %v272 = vld [vmem:[#allocation7 + $0x48] sm:$0xff]
    %v273 = vld [vmem:[#allocation7 + $0x50] sm:$0xff]
    %v274 = vld [vmem:[#allocation7 + $0x58] sm:$0xff]
    %v275 = vld [vmem:[#allocation7 + $0x60] sm:$0xff]
    %v276 = vld [vmem:[#allocation7 + $0x68] sm:$0xff]
    %v277 = vld [vmem:[#allocation7 + $0x70] sm:$0xff]
    %v278 = vld [vmem:[#allocation7 + $0x78] sm:$0xff]
    %v279 = vld [vmem:[#allocation7 + $0x80] sm:$0xff]
    %v280 = vld [vmem:[#allocation7 + $0x88] sm:$0xff]
    %v281 = vld [vmem:[#allocation7 + $0x90] sm:$0xff]
    %v282 = vld [vmem:[#allocation7 + $0x98] sm:$0xff]
    %v283 = vld [vmem:[#allocation7 + $0xa0] sm:$0xff]
    %v284 = vld [vmem:[#allocation7 + $0xa8] sm:$0xff]
    %v285 = vld [vmem:[#allocation7 + $0xb0] sm:$0xff]
    %v286 = vld [vmem:[#allocation7 + $0xb8] sm:$0xff]
    %v287 = vld [vmem:[#allocation7 + $0xc0] sm:$0xff]
    %v288 = vld [vmem:[#allocation7 + $0xc8] sm:$0xff]
    %v289 = vld [vmem:[#allocation7 + $0xd0] sm:$0xff]
    %v290 = vld [vmem:[#allocation7 + $0xd8] sm:$0xff]
    %v291 = vld [vmem:[#allocation7 + $0xe0] sm:$0xff]
    %v292 = vld [vmem:[#allocation7 + $0xe8] sm:$0xff]
    %v293 = vld [vmem:[#allocation7 + $0xf0] sm:$0xff]
    %v294 = vld [vmem:[#allocation7 + $0xf8] sm:$0xff]
    %v295 = vld [vmem:[#allocation7 + $0x100] sm:$0xff]
    %v296 = vld [vmem:[#allocation7 + $0x108] sm:$0xff]
    %v297 = vld [vmem:[#allocation7 + $0x110] sm:$0xff]
    %v298 = vld [vmem:[#allocation7 + $0x118] sm:$0xff]
    %v299 = vld [vmem:[#allocation7 + $0x120] sm:$0xff]
    %v300 = vld [vmem:[#allocation7 + $0x128] sm:$0xff]
    %v301 = vld [vmem:[#allocation7 + $0x130] sm:$0xff]
    %v302 = vld [vmem:[#allocation7 + $0x138] sm:$0xff]
    %v303 = vld [vmem:[#allocation7 + $0x140] sm:$0xff]
    %v304 = vld [vmem:[#allocation7 + $0x148] sm:$0xff]
    %v305 = vld [vmem:[#allocation7 + $0x150] sm:$0xff]
    %v306 = vld [vmem:[#allocation7 + $0x158] sm:$0xff]
    %v307 = vld [vmem:[#allocation7 + $0x160] sm:$0xff]
    %v308 = vld [vmem:[#allocation7 + $0x168] sm:$0xff]
    %v309 = vld [vmem:[#allocation7 + $0x170] sm:$0xff]
    %v310 = vld [vmem:[#allocation7 + $0x178] sm:$0xff]
    %v311 = vld [vmem:[#allocation7 + $0x180] sm:$0xff]
    %v312 = vld [vmem:[#allocation7 + $0x188] sm:$0xff]
    %v313 = vld [vmem:[#allocation7 + $0x190] sm:$0xff]
    %v314 = vld [vmem:[#allocation7 + $0x198] sm:$0xff]
    %v315 = vld [vmem:[#allocation7 + $0x1a0] sm:$0xff]
    %v316 = vld [vmem:[#allocation7 + $0x1a8] sm:$0xff]
    %v317 = vld [vmem:[#allocation7 + $0x1b0] sm:$0xff]
    %v318 = vld [vmem:[#allocation7 + $0x1b8] sm:$0xff]
    %v319 = vld [vmem:[#allocation7 + $0x1c0] sm:$0xff]
    %v320 = vld [vmem:[#allocation7 + $0x1c8] sm:$0xff]
    %v321 = vld [vmem:[#allocation7 + $0x1d0] sm:$0xff]
    %v322 = vld [vmem:[#allocation7 + $0x1d8] sm:$0xff]
    %v323 = vld [vmem:[#allocation7 + $0x1e0] sm:$0xff]
    %v324 = vld [vmem:[#allocation7 + $0x1e8] sm:$0xff]
    %v325 = vld [vmem:[#allocation7 + $0x1f0] sm:$0xff]
    %v326 = vld [vmem:[#allocation7 + $0x1f8] sm:$0xff]
    %v327 = vld [vmem:[%s4] sm:$0x3]
    %v328 = vunpack.c.l.bf16 %v327
    %v330 = vlaneseq
    %v331 = vshrl.u32 %v330, 7
    %v332 = vsub.s32 0, %v331
    %v333 = vrot.slane %v328, %v332
    %v334 = vlaneseq
    %v335 = vshrl.u32 %v334, 7
    %v336 = vsub.s32 2, %v335
    %v337 = vrot.slane %v328, %v336
    %v340 = vlaneseq
    %v341 = vshrl.u32 %v340, 7
    %v342 = vsub.s32 0, %v341
    %v343 = vrot.slane %v333, %v342
    %v344 = vlaneseq
    %v345 = vshrl.u32 %v344, 7
    %v346 = vsub.s32 0, %v345
    %v347 = vrot.slane %v337, %v346
    %v412 = vunpack.c.l.b16 %v263
    %v413 = vunpack.c.h.b16 %v263
    %v414 = vunpack.c.l.b16 %v264
    %v415 = vunpack.c.h.b16 %v264
    %v416 = vunpack.c.l.b16 %v265
    %v417 = vunpack.c.h.b16 %v265
    %v418 = vunpack.c.l.b16 %v266
    %v419 = vunpack.c.h.b16 %v266
    %v420 = vunpack.c.l.b16 %v267
    %v421 = vunpack.c.h.b16 %v267
    %v422 = vunpack.c.l.b16 %v268
    %v423 = vunpack.c.h.b16 %v268
    %v424 = vunpack.c.l.b16 %v269
    %v425 = vunpack.c.h.b16 %v269
    %v426 = vunpack.c.l.b16 %v270
    %v427 = vunpack.c.h.b16 %v270
    %v428 = vunpack.c.l.b16 %v271
    %v429 = vunpack.c.h.b16 %v271
    %v430 = vunpack.c.l.b16 %v272
    %v431 = vunpack.c.h.b16 %v272
    %v432 = vunpack.c.l.b16 %v273
    %v433 = vunpack.c.h.b16 %v273
    %v434 = vunpack.c.l.b16 %v274
    %v435 = vunpack.c.h.b16 %v274
    %v436 = vunpack.c.l.b16 %v275
    %v437 = vunpack.c.h.b16 %v275
    %v438 = vunpack.c.l.b16 %v276
    %v439 = vunpack.c.h.b16 %v276
    %v440 = vunpack.c.l.b16 %v277
    %v441 = vunpack.c.h.b16 %v277
    %v442 = vunpack.c.l.b16 %v278
    %v443 = vunpack.c.h.b16 %v278
    %v444 = vunpack.c.l.b16 %v279
    %v445 = vunpack.c.h.b16 %v279
    %v446 = vunpack.c.l.b16 %v280
    %v447 = vunpack.c.h.b16 %v280
    %v448 = vunpack.c.l.b16 %v281
    %v449 = vunpack.c.h.b16 %v281
    %v450 = vunpack.c.l.b16 %v282
    %v451 = vunpack.c.h.b16 %v282
    %v452 = vunpack.c.l.b16 %v283
    %v453 = vunpack.c.h.b16 %v283
    %v454 = vunpack.c.l.b16 %v284
    %v455 = vunpack.c.h.b16 %v284
    %v456 = vunpack.c.l.b16 %v285
    %v457 = vunpack.c.h.b16 %v285
    %v458 = vunpack.c.l.b16 %v286
    %v459 = vunpack.c.h.b16 %v286
    %v460 = vunpack.c.l.b16 %v287
    %v461 = vunpack.c.h.b16 %v287
    %v462 = vunpack.c.l.b16 %v288
    %v463 = vunpack.c.h.b16 %v288
    %v464 = vunpack.c.l.b16 %v289
    %v465 = vunpack.c.h.b16 %v289
    %v466 = vunpack.c.l.b16 %v290
    %v467 = vunpack.c.h.b16 %v290
    %v468 = vunpack.c.l.b16 %v291
    %v469 = vunpack.c.h.b16 %v291
    %v470 = vunpack.c.l.b16 %v292
    %v471 = vunpack.c.h.b16 %v292
    %v472 = vunpack.c.l.b16 %v293
    %v473 = vunpack.c.h.b16 %v293
    %v474 = vunpack.c.l.b16 %v294
    %v475 = vunpack.c.h.b16 %v294
    %v476 = vunpack.c.l.b16 %v295
    %v477 = vunpack.c.h.b16 %v295
    %v478 = vunpack.c.l.b16 %v296
    %v479 = vunpack.c.h.b16 %v296
    %v480 = vunpack.c.l.b16 %v297
    %v481 = vunpack.c.h.b16 %v297
    %v482 = vunpack.c.l.b16 %v298
    %v483 = vunpack.c.h.b16 %v298
    %v484 = vunpack.c.l.b16 %v299
    %v485 = vunpack.c.h.b16 %v299
    %v486 = vunpack.c.l.b16 %v300
    %v487 = vunpack.c.h.b16 %v300
    %v488 = vunpack.c.l.b16 %v301
    %v489 = vunpack.c.h.b16 %v301
    %v490 = vunpack.c.l.b16 %v302
    %v491 = vunpack.c.h.b16 %v302
    %v492 = vunpack.c.l.b16 %v303
    %v493 = vunpack.c.h.b16 %v303
    %v494 = vunpack.c.l.b16 %v304
    %v495 = vunpack.c.h.b16 %v304
    %v496 = vunpack.c.l.b16 %v305
    %v497 = vunpack.c.h.b16 %v305
    %v498 = vunpack.c.l.b16 %v306
    %v499 = vunpack.c.h.b16 %v306
    %v500 = vunpack.c.l.b16 %v307
    %v501 = vunpack.c.h.b16 %v307
    %v502 = vunpack.c.l.b16 %v308
    %v503 = vunpack.c.h.b16 %v308
    %v504 = vunpack.c.l.b16 %v309
    %v505 = vunpack.c.h.b16 %v309
    %v506 = vunpack.c.l.b16 %v310
    %v507 = vunpack.c.h.b16 %v310
    %v508 = vunpack.c.l.b16 %v311
    %v509 = vunpack.c.h.b16 %v311
    %v510 = vunpack.c.l.b16 %v312
    %v511 = vunpack.c.h.b16 %v312
    %v512 = vunpack.c.l.b16 %v313
    %v513 = vunpack.c.h.b16 %v313
    %v514 = vunpack.c.l.b16 %v314
    %v515 = vunpack.c.h.b16 %v314
    %v516 = vunpack.c.l.b16 %v315
    %v517 = vunpack.c.h.b16 %v315
    %v518 = vunpack.c.l.b16 %v316
    %v519 = vunpack.c.h.b16 %v316
    %v520 = vunpack.c.l.b16 %v317
    %v521 = vunpack.c.h.b16 %v317
    %v522 = vunpack.c.l.b16 %v318
    %v523 = vunpack.c.h.b16 %v318
    %v524 = vunpack.c.l.b16 %v319
    %v525 = vunpack.c.h.b16 %v319
    %v526 = vunpack.c.l.b16 %v320
    %v527 = vunpack.c.h.b16 %v320
    %v528 = vunpack.c.l.b16 %v321
    %v529 = vunpack.c.h.b16 %v321
    %v530 = vunpack.c.l.b16 %v322
    %v531 = vunpack.c.h.b16 %v322
    %v532 = vunpack.c.l.b16 %v323
    %v533 = vunpack.c.h.b16 %v323
    %v534 = vunpack.c.l.b16 %v324
    %v535 = vunpack.c.h.b16 %v324
    %v536 = vunpack.c.l.b16 %v325
    %v537 = vunpack.c.h.b16 %v325
    %v538 = vunpack.c.l.b16 %v326
    %v539 = vunpack.c.h.b16 %v326
    %v540 = vpack.c.b16 %v414, %v412
    %v541 = vpack.c.b16 %v415, %v413
    %v542 = vpack.c.b16 %v418, %v416
    %v543 = vpack.c.b16 %v419, %v417
    %v544 = vpack.c.b16 %v422, %v420
    %v545 = vpack.c.b16 %v423, %v421
    %v546 = vpack.c.b16 %v426, %v424
    %v547 = vpack.c.b16 %v427, %v425
    %v548 = vpack.c.b16 %v430, %v428
    %v549 = vpack.c.b16 %v431, %v429
    %v550 = vpack.c.b16 %v434, %v432
    %v551 = vpack.c.b16 %v435, %v433
    %v552 = vpack.c.b16 %v438, %v436
    %v553 = vpack.c.b16 %v439, %v437
    %v554 = vpack.c.b16 %v442, %v440
    %v555 = vpack.c.b16 %v443, %v441
    %v556 = vpack.c.b16 %v446, %v444
    %v557 = vpack.c.b16 %v447, %v445
    %v558 = vpack.c.b16 %v450, %v448
    %v559 = vpack.c.b16 %v451, %v449
    %v560 = vpack.c.b16 %v454, %v452
    %v561 = vpack.c.b16 %v455, %v453
    %v562 = vpack.c.b16 %v458, %v456
    %v563 = vpack.c.b16 %v459, %v457
    %v564 = vpack.c.b16 %v462, %v460
    %v565 = vpack.c.b16 %v463, %v461
    %v566 = vpack.c.b16 %v466, %v464
    %v567 = vpack.c.b16 %v467, %v465
    %v568 = vpack.c.b16 %v470, %v468
    %v569 = vpack.c.b16 %v471, %v469
    %v570 = vpack.c.b16 %v474, %v472
    %v571 = vpack.c.b16 %v475, %v473
    %v572 = vpack.c.b16 %v478, %v476
    %v573 = vpack.c.b16 %v479, %v477
    %v574 = vpack.c.b16 %v482, %v480
    %v575 = vpack.c.b16 %v483, %v481
    %v576 = vpack.c.b16 %v486, %v484
    %v577 = vpack.c.b16 %v487, %v485
    %v578 = vpack.c.b16 %v490, %v488
    %v579 = vpack.c.b16 %v491, %v489
    %v580 = vpack.c.b16 %v494, %v492
    %v581 = vpack.c.b16 %v495, %v493
    %v582 = vpack.c.b16 %v498, %v496
    %v583 = vpack.c.b16 %v499, %v497
    %v584 = vpack.c.b16 %v502, %v500
    %v585 = vpack.c.b16 %v503, %v501
    %v586 = vpack.c.b16 %v506, %v504
    %v587 = vpack.c.b16 %v507, %v505
    %v588 = vpack.c.b16 %v510, %v508
    %v589 = vpack.c.b16 %v511, %v509
    %v590 = vpack.c.b16 %v514, %v512
    %v591 = vpack.c.b16 %v515, %v513
    %v592 = vpack.c.b16 %v518, %v516
    %v593 = vpack.c.b16 %v519, %v517
    %v594 = vpack.c.b16 %v522, %v520
    %v595 = vpack.c.b16 %v523, %v521
    %v596 = vpack.c.b16 %v526, %v524
    %v597 = vpack.c.b16 %v527, %v525
    %v598 = vpack.c.b16 %v530, %v528
    %v599 = vpack.c.b16 %v531, %v529
    %v600 = vpack.c.b16 %v534, %v532
    %v601 = vpack.c.b16 %v535, %v533
    %v602 = vpack.c.b16 %v538, %v536
    %v603 = vpack.c.b16 %v539, %v537
    %668 = vmatprep.subr.bf16.mxu0 %v541
    %669 = vmatpush1.bf16.msra.mxu0 %v540
    %670 = vmatprep.subr.bf16.mxu0 %v543
    %671 = vmatpush1.bf16.msra.mxu0 %v542
    %672 = vmatprep.subr.bf16.mxu0 %v545
    %673 = vmatpush1.bf16.msra.mxu0 %v544
    %674 = vmatprep.subr.bf16.mxu0 %v547
    %675 = vmatpush1.bf16.msra.mxu0 %v546
    %676 = vmatprep.subr.bf16.mxu0 %v549
    %677 = vmatpush1.bf16.msra.mxu0 %v548
    %678 = vmatprep.subr.bf16.mxu0 %v551
    %679 = vmatpush1.bf16.msra.mxu0 %v550
    %680 = vmatprep.subr.bf16.mxu0 %v553
    %681 = vmatpush1.bf16.msra.mxu0 %v552
    %682 = vmatprep.subr.bf16.mxu0 %v555
    %683 = vmatpush1.bf16.msra.mxu0 %v554
    %684 = vmatprep.subr.bf16.mxu0 %v557
    %685 = vmatpush1.bf16.msra.mxu0 %v556
    %686 = vmatprep.subr.bf16.mxu0 %v559
    %687 = vmatpush1.bf16.msra.mxu0 %v558
    %688 = vmatprep.subr.bf16.mxu0 %v561
    %689 = vmatpush1.bf16.msra.mxu0 %v560
    %690 = vmatprep.subr.bf16.mxu0 %v563
    %691 = vmatpush1.bf16.msra.mxu0 %v562
    %692 = vmatprep.subr.bf16.mxu0 %v565
    %693 = vmatpush1.bf16.msra.mxu0 %v564
    %694 = vmatprep.subr.bf16.mxu0 %v567
    %695 = vmatpush1.bf16.msra.mxu0 %v566
    %696 = vmatprep.subr.bf16.mxu0 %v569
    %697 = vmatpush1.bf16.msra.mxu0 %v568
    %698 = vmatprep.subr.bf16.mxu0 %v571
    %699 = vmatpush1.bf16.msra.mxu0 %v570
    %700 = vmatprep.mubr.bf16.mxu0 %v260
    %701 = vmatmul.mubr.bf16.gmra.mrb[0].mxu0 %v259
    %v702 = vpop.f32.mrb[0].mxu0
    %v703 = vadd.f32 %v343, %v702
    %v704 = vpop.f32.mrb[0].mxu0
    %v705 = vadd.f32 %v347, %v704
    %v706 = vpop.f32.mrb[0].mxu0
    %v707 = vpop.f32.mrb[0].mxu0
    %708 = vdwg.mxu0
    %709 = vmatprep.subr.bf16.mxu0 %v573
    %710 = vmatpush1.bf16.msra.mxu0 %v572
    %711 = vmatprep.subr.bf16.mxu0 %v575
    %712 = vmatpush1.bf16.msra.mxu0 %v574
    %713 = vmatprep.subr.bf16.mxu0 %v577
    %714 = vmatpush1.bf16.msra.mxu0 %v576
    %715 = vmatprep.subr.bf16.mxu0 %v579
    %716 = vmatpush1.bf16.msra.mxu0 %v578
    %717 = vmatprep.subr.bf16.mxu0 %v581
    %718 = vmatpush1.bf16.msra.mxu0 %v580
    %719 = vmatprep.subr.bf16.mxu0 %v583
    %720 = vmatpush1.bf16.msra.mxu0 %v582
    %721 = vmatprep.subr.bf16.mxu0 %v585
    %722 = vmatpush1.bf16.msra.mxu0 %v584
    %723 = vmatprep.subr.bf16.mxu0 %v587
    %724 = vmatpush1.bf16.msra.mxu0 %v586
    %725 = vmatprep.subr.bf16.mxu0 %v589
    %726 = vmatpush1.bf16.msra.mxu0 %v588
    %727 = vmatprep.subr.bf16.mxu0 %v591
    %728 = vmatpush1.bf16.msra.mxu0 %v590
    %729 = vmatprep.subr.bf16.mxu0 %v593
    %730 = vmatpush1.bf16.msra.mxu0 %v592
    %731 = vmatprep.subr.bf16.mxu0 %v595
    %732 = vmatpush1.bf16.msra.mxu0 %v594
    %733 = vmatprep.subr.bf16.mxu0 %v597
    %734 = vmatpush1.bf16.msra.mxu0 %v596
    %735 = vmatprep.subr.bf16.mxu0 %v599
    %736 = vmatpush1.bf16.msra.mxu0 %v598
    %737 = vmatprep.subr.bf16.mxu0 %v601
    %738 = vmatpush1.bf16.msra.mxu0 %v600
    %739 = vmatprep.subr.bf16.mxu0 %v603
    %740 = vmatpush1.bf16.msra.mxu0 %v602
    %741 = vmatprep.mubr.bf16.mxu0 %v262
    %742 = vmatmul.mubr.bf16.gmra.mrb[0].mxu0 %v261
    %v743 = vpop.f32.mrb[0].mxu0
    %v744 = vadd.f32 %v703, %v743
    %v745 = vpop.f32.mrb[0].mxu0
    %v746 = vadd.f32 %v705, %v745
    %v747 = vpop.f32.mrb[0].mxu0
    %v748 = vpop.f32.mrb[0].mxu0
    %749 = vdwg.mxu0
    %v750 = vmax.f32 %v744, 0.0
    %v751 = vmax.f32 %v746, 0.0
    %v752 = vpack.c.bf16 %v750, %v750
    %v753 = vpack.c.bf16 %v751, %v751
    %v754 = vld [vmem:[#allocation8] sm:$0xf]
    %v755 = vld [vmem:[#allocation8 + $0x4] sm:$0xf]
    %v756 = vld [vmem:[#allocation8 + $0x8] sm:$0xf]
    %v757 = vld [vmem:[#allocation8 + $0xc] sm:$0xf]
    %v758 = vld [vmem:[#allocation8 + $0x10] sm:$0xf]
    %v759 = vld [vmem:[#allocation8 + $0x14] sm:$0xf]
    %v760 = vld [vmem:[#allocation8 + $0x18] sm:$0xf]
    %v761 = vld [vmem:[#allocation8 + $0x1c] sm:$0xf]
    %v762 = vld [vmem:[#allocation8 + $0x20] sm:$0xf]
    %v763 = vld [vmem:[#allocation8 + $0x24] sm:$0xf]
    %v764 = vld [vmem:[#allocation8 + $0x28] sm:$0xf]
    %v765 = vld [vmem:[#allocation8 + $0x2c] sm:$0xf]
    %v766 = vld [vmem:[#allocation8 + $0x30] sm:$0xf]
    %v767 = vld [vmem:[#allocation8 + $0x34] sm:$0xf]
    %v768 = vld [vmem:[#allocation8 + $0x38] sm:$0xf]
    %v769 = vld [vmem:[#allocation8 + $0x3c] sm:$0xf]
    %v770 = vld [vmem:[#allocation8 + $0x40] sm:$0xf]
    %v771 = vld [vmem:[#allocation8 + $0x44] sm:$0xf]
    %v772 = vld [vmem:[#allocation8 + $0x48] sm:$0xf]
    %v773 = vld [vmem:[#allocation8 + $0x4c] sm:$0xf]
    %v774 = vld [vmem:[#allocation8 + $0x50] sm:$0xf]
    %v775 = vld [vmem:[#allocation8 + $0x54] sm:$0xf]
    %v776 = vld [vmem:[#allocation8 + $0x58] sm:$0xf]
    %v777 = vld [vmem:[#allocation8 + $0x5c] sm:$0xf]
    %v778 = vld [vmem:[#allocation8 + $0x60] sm:$0xf]
    %v779 = vld [vmem:[#allocation8 + $0x64] sm:$0xf]
    %v780 = vld [vmem:[#allocation8 + $0x68] sm:$0xf]
    %v781 = vld [vmem:[#allocation8 + $0x6c] sm:$0xf]
    %v782 = vld [vmem:[#allocation8 + $0x70] sm:$0xf]
    %v783 = vld [vmem:[#allocation8 + $0x74] sm:$0xf]
    %v784 = vld [vmem:[#allocation8 + $0x78] sm:$0xf]
    %v785 = vld [vmem:[#allocation8 + $0x7c] sm:$0xf]
    %v786 = vld [vmem:[%s6] sm:$0x1]
    %v787 = vunpack.c.l.bf16 %v786
    %v788 = vlaneseq
    %v789 = vshrl.u32 %v788, 7
    %v790 = vsub.s32 0, %v789
    %v791 = vrot.slane %v787, %v790
    %v824 = vunpack.c.l.b16 %v754
    %v825 = vunpack.c.l.b16 %v755
    %v826 = vunpack.c.l.b16 %v756
    %v827 = vunpack.c.l.b16 %v757
    %v828 = vunpack.c.l.b16 %v758
    %v829 = vunpack.c.l.b16 %v759
    %v830 = vunpack.c.l.b16 %v760
    %v831 = vunpack.c.l.b16 %v761
    %v832 = vunpack.c.l.b16 %v762
    %v833 = vunpack.c.l.b16 %v763
    %v834 = vunpack.c.l.b16 %v764
    %v835 = vunpack.c.l.b16 %v765
    %v836 = vunpack.c.l.b16 %v766
    %v837 = vunpack.c.l.b16 %v767
    %v838 = vunpack.c.l.b16 %v768
    %v839 = vunpack.c.l.b16 %v769
    %v840 = vunpack.c.l.b16 %v770
    %v841 = vunpack.c.l.b16 %v771
    %v842 = vunpack.c.l.b16 %v772
    %v843 = vunpack.c.l.b16 %v773
    %v844 = vunpack.c.l.b16 %v774
    %v845 = vunpack.c.l.b16 %v775
    %v846 = vunpack.c.l.b16 %v776
    %v847 = vunpack.c.l.b16 %v777
    %v848 = vunpack.c.l.b16 %v778
    %v849 = vunpack.c.l.b16 %v779
    %v850 = vunpack.c.l.b16 %v780
    %v851 = vunpack.c.l.b16 %v781
    %v852 = vunpack.c.l.b16 %v782
    %v853 = vunpack.c.l.b16 %v783
    %v854 = vunpack.c.l.b16 %v784
    %v855 = vunpack.c.l.b16 %v785
    %v856 = vpack.c.b16 %v825, %v824
    %v857 = vpack.c.b16 %v827, %v826
    %v858 = vpack.c.b16 %v829, %v828
    %v859 = vpack.c.b16 %v831, %v830
    %v860 = vpack.c.b16 %v833, %v832
    %v861 = vpack.c.b16 %v835, %v834
    %v862 = vpack.c.b16 %v837, %v836
    %v863 = vpack.c.b16 %v839, %v838
    %v864 = vpack.c.b16 %v841, %v840
    %v865 = vpack.c.b16 %v843, %v842
    %v866 = vpack.c.b16 %v845, %v844
    %v867 = vpack.c.b16 %v847, %v846
    %v868 = vpack.c.b16 %v849, %v848
    %v869 = vpack.c.b16 %v851, %v850
    %v870 = vpack.c.b16 %v853, %v852
    %v871 = vpack.c.b16 %v855, %v854
    %888 = vmatprep.subr.bf16.mxu0 0
    %889 = vmatpush1.bf16.msra.mxu0 %v856
    %890 = vmatprep.subr.bf16.mxu0 0
    %891 = vmatpush1.bf16.msra.mxu0 %v857
    %892 = vmatprep.subr.bf16.mxu0 0
    %893 = vmatpush1.bf16.msra.mxu0 %v858
    %894 = vmatprep.subr.bf16.mxu0 0
    %895 = vmatpush1.bf16.msra.mxu0 %v859
    %896 = vmatprep.subr.bf16.mxu0 0
    %897 = vmatpush1.bf16.msra.mxu0 %v860
    %898 = vmatprep.subr.bf16.mxu0 0
    %899 = vmatpush1.bf16.msra.mxu0 %v861
    %900 = vmatprep.subr.bf16.mxu0 0
    %901 = vmatpush1.bf16.msra.mxu0 %v862
    %902 = vmatprep.subr.bf16.mxu0 0
    %903 = vmatpush1.bf16.msra.mxu0 %v863
    %904 = vmatprep.subr.bf16.mxu0 0
    %905 = vmatpush1.bf16.msra.mxu0 %v864
    %906 = vmatprep.subr.bf16.mxu0 0
    %907 = vmatpush1.bf16.msra.mxu0 %v865
    %908 = vmatprep.subr.bf16.mxu0 0
    %909 = vmatpush1.bf16.msra.mxu0 %v866
    %910 = vmatprep.subr.bf16.mxu0 0
    %911 = vmatpush1.bf16.msra.mxu0 %v867
    %912 = vmatprep.subr.bf16.mxu0 0
    %913 = vmatpush1.bf16.msra.mxu0 %v868
    %914 = vmatprep.subr.bf16.mxu0 0
    %915 = vmatpush1.bf16.msra.mxu0 %v869
    %916 = vmatprep.subr.bf16.mxu0 0
    %917 = vmatpush1.bf16.msra.mxu0 %v870
    %918 = vmatprep.subr.bf16.mxu0 0
    %919 = vmatpush1.bf16.msra.mxu0 %v871
    %920 = vmatprep.mubr.bf16.mxu0 %v753
    %921 = vmatmul.mubr.bf16.gmra.mrb[0].mxu0 %v752
    %v922 = vpop.f32.mrb[0].mxu0
    %v923 = vadd.f32 %v791, %v922
    %v924 = vpop.f32.mrb[0].mxu0
    %v925 = vpop.f32.mrb[0].mxu0
    %v926 = vpop.f32.mrb[0].mxu0
    %927 = vdwg.mxu0
    %928 = vst [vmem:[#allocation10] sm:$0xff] %v923
    // Predicated region
    $region46: #{tpu_custom_call.1} parent=1 // pred_check
      _
    $region47: #{tpu_custom_call.1} parent=1 // pred_check_branch
      %930 = sbr.rel (0) target = $region49
    $region48: #{tpu_custom_call.1} parent=1 // pred_region
      %s932 = ssub.s32 128, 128
      %933 = vsyncadd [#allocation4], %s932
      %s935 = sshll.u32 [#allocation10], 4
      %s936 = int_to_ptr.vmem [resolvable:$true] %s935
      %938 = dma.vmem_to_hbm [thread:$0]  %s936, 128, %s7, [#allocation4]
    $region49: #{tpu_custom_call.1} parent=1 // pred_fallthru
      _
    // Predicated region
    $region50: #{tpu_custom_call.1} parent=1 // pred_check
      _
    $region51: #{tpu_custom_call.1} parent=1 // pred_check_branch
      %940 = sbr.rel (0) target = $region53
    $region52: #{tpu_custom_call.1} parent=1 // pred_region
      %941 = dma.done [#allocation4], 128
    $region53: #{tpu_custom_call.1} parent=1 // pred_fallthru
      _
    %942 = vsyncpa [#allocation3], 1
    %943 = vsyncpa [#allocation6], 1
    %944 = vsyncpa [#allocation9], 1
    %945 = vsyncpa [#allocation4], 1

</llo_original>
